<compile_context>
chip_gen: v6e
topology: v6e:2x2x1
jax: 0.10.0
libtpu: 0.0.40
codegen_flags: <defaults>
</compile_context>

<pallas_src>
import jax
import jax.numpy as jnp
from jax import lax
from jax.experimental import pallas as pl
from jax.experimental.pallas import tpu as pltpu


TILE_MEL = 512  # lane tile for the mel/frame axis; must be a multiple of 128


def _length_regulator_kernel(cum_ref, out_ref):
    """mel2token[p] = #{t : dur_cumsum[t] <= p} + 1, or 0 once p >= row total.

    cum_ref : (1, T_txt, 1)   int32  cumulative durations (dur_cumsum)
    out_ref : (1, 1, TILE)    int32  mel2token lane-tile for this batch element
    """
    j = pl.program_id(0)                 # mel tile index (leading grid axis)
    cum = cum_ref[0]                     # (T_txt, 1)
    t_txt = cum.shape[0]
    tile = out_ref.shape[2]

    # Frame positions covered by this lane tile (token axis on sublanes).
    pos = j * tile + lax.broadcasted_iota(jnp.int32, (t_txt, tile), 1)

    # Single compare + sublane reduce: how many tokens have already finished.
    cnt = jnp.sum((cum <= pos).astype(jnp.int32), axis=0, keepdims=True)  # (1, tile)

    # cnt == T_txt  <=>  pos >= total frames of this row (cum is nondecreasing
    # and cum[-1] is the row total)  ->  pad with 0, else 1-indexed token id.
    out_ref[0] = jnp.where(cnt < t_txt, cnt + 1, 0)


def length_regulator(dur, dur_padding=None, alpha=1.0, pad_value=0.0,
                     tile_mel=TILE_MEL):
    """JAX/Pallas equivalent of LengthRegulator.forward. Returns int32 (B, T_mel)."""
    assert alpha > 0
    assert tile_mel % 128 == 0
    B, T_txt = dur.shape

    # ---- glue (plain JAX): rescale / round / mask padding / cumsum ----
    dur_i = jnp.round(dur.astype(jnp.float32) * alpha).astype(jnp.int32)
    if dur_padding is not None:
        dur_i = dur_i * (1 - dur_padding.astype(jnp.int32))
    dur_cumsum = jnp.cumsum(dur_i, axis=1)               # (B, T_txt)

    # Output length is data dependent -> concretize on host (eager wrapper).
    T_mel = int(jnp.max(dur_cumsum[:, -1]))
    if T_mel <= 0:
        return jnp.zeros((B, 0), jnp.int32)

    # Bucket the mel axis to a multiple of the lane tile:
    #   * lane-dense unmasked stores + clean divisibility for the tiled grid
    #   * bounded set of shapes -> amortized Mosaic compiles for varying T_mel
    T_mel_pad = pl.cdiv(T_mel, tile_mel) * tile_mel
    n_tiles = T_mel_pad // tile_mel

    cum3 = dur_cumsum[:, :, None]                        # (B, T_txt, 1)

    out = pl.pallas_call(
        _length_regulator_kernel,
        out_shape=jax.ShapeDtypeStruct((B, 1, T_mel_pad), jnp.int32),
        grid_spec=pltpu.PrefetchScalarGridSpec(
            num_scalar_prefetch=0,
            grid=(n_tiles, B),   # mel tiles leading: 2-TC split on v7x even at B=1
            in_specs=[
                pl.BlockSpec((1, T_txt, 1), lambda j, b: (b, 0, 0)),
            ],
            out_specs=pl.BlockSpec((1, 1, tile_mel), lambda j, b: (b, 0, j)),
        ),
        compiler_params=pltpu.CompilerParams(
            dimension_semantics=("parallel", "parallel")),
    )(cum3)

    return out[:, 0, :T_mel]                             # (B, T_mel)


def _length_regulator_ref(dur, dur_padding=None, alpha=1.0):
    """Pure-JAX reference mirroring the PyTorch code, for verification."""
    dur_i = jnp.round(dur.astype(jnp.float32) * alpha).astype(jnp.int32)
    if dur_padding is not None:
        dur_i = dur_i * (1 - dur_padding.astype(jnp.int32))
    token_idx = jnp.arange(1, dur_i.shape[1] + 1)[None, :, None]
    dur_cumsum = jnp.cumsum(dur_i, axis=1)
    dur_cumsum_prev = dur_cumsum - dur_i
    T_mel = int(jnp.max(jnp.sum(dur_i, axis=-1)))
    pos_idx = jnp.arange(T_mel)[None, None]
    token_mask = (pos_idx >= dur_cumsum_prev[:, :, None]) & \
                 (pos_idx < dur_cumsum[:, :, None])
    return jnp.sum(token_idx * token_mask.astype(jnp.int32), axis=1)


if __name__ == "__main__":
    key = jax.random.PRNGKey(0)
    k1, k2 = jax.random.split(key)

    # Test 1: small fractional durations, last two tokens padded (single tile).
    B, T_txt = 2, 8
    dur = jax.random.uniform(k1, (B, T_txt), minval=0.0, maxval=5.0)
    dur_padding = jnp.zeros((B, T_txt), jnp.int32).at[:, -2:].set(1)

    mel2token = length_regulator(dur, dur_padding=dur_padding, alpha=1.0)
    jax.block_until_ready(mel2token)
    ref = _length_regulator_ref(dur, dur_padding=dur_padding, alpha=1.0)
    assert mel2token.shape == ref.shape, (mel2token.shape, ref.shape)
    assert bool(jnp.all(mel2token == ref)), "Pallas result mismatch vs reference (test 1)"

    # Test 2: longer durations with a small lane tile -> exercises multiple
    # mel tiles and the cross-tile frame indexing.
    B2, T_txt2 = 2, 16
    dur2 = jax.random.uniform(k2, (B2, T_txt2), minval=10.0, maxval=30.0)
    dur_padding2 = jnp.zeros((B2, T_txt2), jnp.int32).at[:, -2:].set(1)

    mel2token2 = length_regulator(dur2, dur_padding=dur_padding2, alpha=1.0,
                                  tile_mel=128)
    jax.block_until_ready(mel2token2)
    ref2 = _length_regulator_ref(dur2, dur_padding=dur_padding2, alpha=1.0)
    assert mel2token2.shape == ref2.shape, (mel2token2.shape, ref2.shape)
    assert bool(jnp.all(mel2token2 == ref2)), "Pallas result mismatch vs reference (test 2)"

    print("KERNEL_OK")
</pallas_src>

<mosaic_0001>
module attributes {stable_mosaic.version = 11 : i64} {
  func.func @_length_regulator_kernel(%arg0: i32, %arg1: i32, %arg2: memref<1x8x1xi32, #tpu.memory_space<vmem>>, %arg3: memref<1x1x512xi32, #tpu.memory_space<vmem>>) attributes {dimension_semantics = [#tpu.dimension_semantics<parallel>, #tpu.dimension_semantics<parallel>], iteration_bounds = array<i64: 1, 2>, scalar_prefetch = 0 : i64, scratch_operands = 0 : i64, tpu.core_type = #tpu.core_type<tc>, window_params = [{transform_indices = @transform_0, window_bounds = array<i64: 1, 8, 1>}, {transform_indices = @transform_1, window_bounds = array<i64: 1, 1, 512>}]} {
    %c0 = arith.constant 0 : index
    %c0_0 = arith.constant 0 : index
    %c0_1 = arith.constant 0 : index
    %0 = vector.load %arg2[%c0, %c0_0, %c0_1] : memref<1x8x1xi32, #tpu.memory_space<vmem>>, vector<1x8x1xi32>
    %1 = vector.shape_cast %0 : vector<1x8x1xi32> to vector<8x1xi32>
    %c512_i32 = arith.constant 512 : i32
    %2 = arith.muli %arg0, %c512_i32 : i32
    %3 = tpu.iota {dimensions = array<i32: 1>} : vector<8x512xi32>
    %4 = vector.broadcast %2 : i32 to vector<8x512xi32>
    %5 = arith.addi %4, %3 : vector<8x512xi32>
    %6 = vector.broadcast %1 : vector<8x1xi32> to vector<8x512xi32>
    %7 = arith.cmpi sle, %6, %5 : vector<8x512xi32>
    %8 = arith.extui %7 : vector<8x512xi1> to vector<8x512xi32>
    %cst = arith.constant dense<0> : vector<512xi32>
    %9 = vector.multi_reduction <add>, %8, %cst [0] : vector<8x512xi32> to vector<512xi32>
    %10 = vector.shape_cast %9 : vector<512xi32> to vector<1x512xi32>
    %c8_i32 = arith.constant 8 : i32
    %11 = vector.broadcast %c8_i32 : i32 to vector<1x512xi32>
    %12 = arith.cmpi slt, %10, %11 : vector<1x512xi32>
    %c1_i32 = arith.constant 1 : i32
    %13 = vector.broadcast %c1_i32 : i32 to vector<1x512xi32>
    %14 = arith.addi %10, %13 : vector<1x512xi32>
    %c0_i32 = arith.constant 0 : i32
    %15 = vector.broadcast %c0_i32 : i32 to vector<1x512xi32>
    %16 = arith.select %12, %14, %15 : vector<1x512xi1>, vector<1x512xi32>
    %c0_2 = arith.constant 0 : index
    %c0_3 = arith.constant 0 : index
    %c0_4 = arith.constant 0 : index
    %17 = vector.load %arg3[%c0_2, %c0_3, %c0_4] : memref<1x1x512xi32, #tpu.memory_space<vmem>>, vector<1x1x512xi32>
    %18 = vector.shape_cast %17 : vector<1x1x512xi32> to vector<1x512xi32>
    %19 = vector.shape_cast %16 : vector<1x512xi32> to vector<1x1x512xi32>
    tpu.vector_store %arg3[%c0_2, %c0_3, %c0_4], %19 {strides = array<i32>} : memref<1x1x512xi32, #tpu.memory_space<vmem>>, vector<1x1x512xi32>,
    return
  }
  func.func @transform_0(%arg0: i32, %arg1: i32) -> (i32, i32, i32) {
    %c0_i32 = arith.constant 0 : i32
    %c0_i32_0 = arith.constant 0 : i32
    %c0_i32_1 = arith.constant 0 : i32
    return %arg1, %c0_i32, %c0_i32_0 : i32, i32, i32
  }
  func.func @transform_1(%arg0: i32, %arg1: i32) -> (i32, i32, i32) {
    %c0_i32 = arith.constant 0 : i32
    %c0_i32_0 = arith.constant 0 : i32
    return %arg1, %c0_i32, %arg0 : i32, i32, i32
  }
}

</mosaic_0001>

<llo_original>
// kernel: tpu_custom_call.1
$region0: #{tpu_custom_call.1}
  #allocation0 [shape = 'u32[]', space=smem, size = 0x4, offset = 0x4, fixed_abs, tag = 'smem constant byte address 0x4 - core index']
  #allocation1 [shape = 'u32[144,128]{1,0:T(1,128)}', space=vmem, size = 0x12000, scoped, tag = 'internal scratch']
  %s0 = inlined_call_operand.vmem [shape: s32[2,8,1], index: 0, kind: input, shape index: {}]
  %s1 = inlined_call_operand.hbm [shape: s32[2,1,512], index: 1, kind: output, shape index: {}]
  %s2 = sld [smem:[#allocation0]]
  $region37: #{tpu_custom_call.1} parent=0
    _
  %s4 = ssub.s32 1, %s2
  %s5 = scalar_select 0, %s4, %s2
  $region1: #{tpu_custom_call.1} parent=0
    #allocation2 [shape = 'u8[4096]{0}', space=vmem, size = 0x1000, scoped, tag = 'output window, operand 0']
    #allocation3 [shape = 's32[2]{0}', space=sflag, size = 0x8, scoped, tag = 'scoped memory for tpu_custom_call.1']
    %6 = vsyncpa [#allocation3], 0
    %s7 = scalar_lea.sflag [#allocation3], 1
    %8 = vsyncpa %s7, 0
    loop: start=0, step=1, limit=4
    $region2: #{tpu_custom_call.1} parent=1 // loop_pre_header
      _
    $region3: #{tpu_custom_call.1} parent=1 // loop_header
      %s10 = sphi 0, %s14
      %p11 = scmp.ge.s32.totalorder %s10, 4
      %s17 = sphi 0, %s29
      %s18 = sphi 0, %s25
      %s19 = sphi 0, %s17
      %s20 = sphi 0, %s18
      %s21 = sphi 0, %s19
      %s22 = sphi 0, %s20
      %s32 = sphi 0, %s34
      %s35 = sphi 0, %s32
      %s36 = sphi 0, %s35
      %s52 = sphi 0, %s36
      %s60 = sphi 0, %s62
      %s63 = sphi 0, %s60
      %s64 = sphi 0, %s63
      %s80 = sphi 0, %s64
    $region4: #{tpu_custom_call.1} parent=1 // loop_header_branch
      %13 = sbr.rel (%p11) target = $region8
    $region5: #{tpu_custom_call.1} parent=1 // loop_body
      %s15 = ssub.s32 %s10, 1
      %s16 = ssub.s32 %s10, 2
      %s23 = sadd.s32 1, %s18
      %p24 = scmp.ge.s32.totalorder %s23, 2
      %s25 = scalar_select %p24, 0, %s23
      %s26 = sadd.s32 1, %s17
      %s27 = scalar_select %p24, %s26, %s17
      %p28 = scmp.ge.s32.totalorder %s27, 1
      %s29 = scalar_select %p28, 0, %s27
      %s30 = ssub.s32 %s18, %s25
      %p31 = scmp.eq.s32.totalorder %s30, 0
      %s33 = sadd.s32 %s32, 1
      %s34 = scalar_select %p31, %s32, %s33
      %p37 = pneg %p31
      %p38 = scmp.eq.s32.totalorder %s10, 1
      %p39 = por %p37, %p38
      %p40 = scmp.ne.s32.totalorder %s32, %s35
      %p41 = scmp.eq.s32.totalorder %s10, 0
      %p42 = por %p40, %p41
      %p43 = scmp.ne.s32.totalorder %s32, %s35
      %p44 = scmp.eq.s32.totalorder %s15, 1
      %p45 = por %p43, %p44
      %p46 = scmp.ne.s32.totalorder %s35, %s36
      %p47 = scmp.eq.s32.totalorder %s15, 0
      %p48 = por %p46, %p47
      %p49 = scmp.ne.s32.totalorder %s35, %s36
      %p50 = scmp.eq.s32.totalorder %s16, 1
      %p51 = por %p49, %p50
      %p53 = scmp.ne.s32.totalorder %s36, %s52
      %p54 = scmp.eq.s32.totalorder %s16, 0
      %p55 = por %p53, %p54
      %s56 = ssub.s32 %s18, %s25
      %s57 = ssub.s32 %s17, %s29
      %s58 = sor.u32 %s56, %s57
      %p59 = scmp.eq.s32.totalorder %s58, 0
      %s61 = sadd.s32 %s60, 1
      %s62 = scalar_select %p59, %s60, %s61
      %p65 = pneg %p59
      %p66 = scmp.eq.s32.totalorder %s10, 1
      %p67 = por %p65, %p66
      %p68 = scmp.ne.s32.totalorder %s60, %s63
      %p69 = scmp.eq.s32.totalorder %s10, 0
      %p70 = por %p68, %p69
      %p71 = scmp.ne.s32.totalorder %s60, %s63
      %p72 = scmp.eq.s32.totalorder %s15, 1
      %p73 = por %p71, %p72
      %p74 = scmp.ne.s32.totalorder %s63, %s64
      %p75 = scmp.eq.s32.totalorder %s15, 0
      %p76 = por %p74, %p75
      %p77 = scmp.ne.s32.totalorder %s63, %s64
      %p78 = scmp.eq.s32.totalorder %s16, 1
      %p79 = por %p77, %p78
      %p81 = scmp.ne.s32.totalorder %s64, %s80
      %p82 = scmp.eq.s32.totalorder %s16, 0
      %p83 = por %p81, %p82
      %p84 = scmp.le.s32.totalorder 1, %s10
      %p85 = scmp.lt.s32.totalorder %s10, 3
      %p86 = pnand %p84, %p85
      %p87 = pneg %p86
      // Predicated region
      $region9: #{tpu_custom_call.1} parent=5 // pred_check
        _
      $region10: #{tpu_custom_call.1} parent=5 // pred_check_branch
        %89 = sbr.rel (%p86) target = $region12
      $region11: #{tpu_custom_call.1} parent=5 // pred_region
        %s90 = ssub.s32 %s10, 1
      $region12: #{tpu_custom_call.1} parent=5 // pred_fallthru
        _
      %p91 = scmp.lt.s32.totalorder %s10, 2
      // Predicated region
      $region13: #{tpu_custom_call.1} parent=5 // pred_check
        %p92 = pneg %p91
      $region14: #{tpu_custom_call.1} parent=5 // pred_check_branch
        %94 = sbr.rel (%p92) target = $region16
      $region15: #{tpu_custom_call.1} parent=5 // pred_region
        // Predicated region
        $region17: #{tpu_custom_call.1} parent=15 // pred_check
          %p95 = pneg %p42
        $region18: #{tpu_custom_call.1} parent=15 // pred_check_branch
          %97 = sbr.rel (%p95) target = $region20
        $region19: #{tpu_custom_call.1} parent=15 // pred_region
          %p98 = scmp.lt.s32.totalorder %s18, 1
          %s99 = scalar_select %p98, %s18, 1
          %s100 = smul.addr %s99, 8
          %s101 = scalar_lea.vmem %s0, %s100
        $region20: #{tpu_custom_call.1} parent=15 // pred_fallthru
          _
      $region16: #{tpu_custom_call.1} parent=5 // pred_fallthru
        _
      %p102 = scmp.le.s32.totalorder 1, %s10
      %p103 = scmp.lt.s32.totalorder %s10, 3
      %p104 = pnand %p102, %p103
      %p105 = pneg %p104
      // Predicated region
      $region21: #{tpu_custom_call.1} parent=5 // pred_check
        _
      $region22: #{tpu_custom_call.1} parent=5 // pred_check_branch
        %107 = sbr.rel (%p104) target = $region24
      $region23: #{tpu_custom_call.1} parent=5 // pred_region
        %s108 = ssub.s32 %s10, 1
        %p109 = scmp.lt.s32.totalorder %s20, 1
        %s110 = scalar_select %p109, %s20, 1
        %s111 = smul.addr %s110, 8
        %s112 = scalar_lea.vmem %s0, %s111
        %p113 = pneg %p48
        %p114 = pneg %p45
        %p115 = pneg %p76
        %p116 = pneg %p73
        %s117 = sand.u32 %s63, 1
        %s118 = scalar_lea.sflag [#allocation3], %s117
        %s119 = sand.u32 %s63, 1
        %s120 = smul.addr %s119, 4
        %s121 = scalar_lea.vmem [#allocation2], %s120
        %p122 = scmp.lt.s32.totalorder %s20, 1
        %s123 = scalar_select %p122, %s20, 1
        %s124 = smul.addr %s123, 8
        %s125 = scalar_lea.vmem %s0, %s124
        %s126 = smul.u32 4, %s19
        %v127 = vld [vmem:[%s125] sm:$0xff]
        %s128 = smul.u32 %s19, 512
        %v129 = vlaneseq
        %v130 = vand.u32 %v129, 127
        %v131 = vadd.s32 %v130, 128
        %v132 = vadd.s32 %v130, 256
        %v133 = vadd.s32 %v130, 384
        %v134 = vstv %s128
        %v135 = vadd.s32 %v134, %v130
        %v136 = vadd.s32 %v134, %v131
        %v137 = vadd.s32 %v134, %v132
        %v138 = vadd.s32 %v134, %v133
        %139 = vset.pattern.permute.xlu0 0
        %140 = vperm.xlu0 %139, %v127
        %v141 = vpop.permute.xlu0 %140
        %vm142 = vcmp.le.s32.totalorder %v141, %v135
        %vm143 = vcmp.le.s32.totalorder %v141, %v136
        %vm144 = vcmp.le.s32.totalorder %v141, %v137
        %vm145 = vcmp.le.s32.totalorder %v141, %v138
        %v146 = vsel %vm142, 1, 0
        %v147 = vsel %vm143, 1, 0
        %v148 = vsel %vm144, 1, 0
        %v149 = vsel %vm145, 1, 0
        %v150 = vrot.slane %v146, 4
        %v151 = vadd.s32 %v146, %v150
        %v152 = vrot.slane %v151, 2
        %v153 = vadd.s32 %v151, %v152
        %v154 = vrot.slane %v153, 1
        %v155 = vadd.s32 %v153, %v154
        %v156 = vrot.slane %v147, 4
        %v157 = vadd.s32 %v147, %v156
        %v158 = vrot.slane %v157, 2
        %v159 = vadd.s32 %v157, %v158
        %v160 = vrot.slane %v159, 1
        %v161 = vadd.s32 %v159, %v160
        %v162 = vrot.slane %v148, 4
        %v163 = vadd.s32 %v148, %v162
        %v164 = vrot.slane %v163, 2
        %v165 = vadd.s32 %v163, %v164
        %v166 = vrot.slane %v165, 1
        %v167 = vadd.s32 %v165, %v166
        %v168 = vrot.slane %v149, 4
        %v169 = vadd.s32 %v149, %v168
        %v170 = vrot.slane %v169, 2
        %v171 = vadd.s32 %v169, %v170
        %v172 = vrot.slane %v171, 1
        %v173 = vadd.s32 %v171, %v172
        %vm174 = vcmp.lt.s32.totalorder %v155, 8
        %vm175 = vcmp.lt.s32.totalorder %v161, 8
        %vm176 = vcmp.lt.s32.totalorder %v167, 8
        %vm177 = vcmp.lt.s32.totalorder %v173, 8
        %v178 = vadd.s32 %v155, 1
        %v179 = vadd.s32 %v161, 1
        %v180 = vadd.s32 %v167, 1
        %v181 = vadd.s32 %v173, 1
        %v182 = vsel %vm174, %v178, 0
        %v183 = vsel %vm175, %v179, 0
        %v184 = vsel %vm176, %v180, 0
        %v185 = vsel %vm177, %v181, 0
        %v186 = vcombine.low %v182, %v183
        %v187 = vcombine.low %v184, %v185
        %v189 = vunpack.c.l.s4 1966171168
        %v190 = vunpack.c.0.s8 %v189
        %v191 = vlaneseq
        %v192 = vshrl.u32 %v191, 7
        %v193 = vsub.s32 %v190, %v192
        %v194 = vrot.slane %v186, %v193
        %v196 = vunpack.c.l.s4 1966171168
        %v197 = vunpack.c.0.s8 %v196
        %v198 = vlaneseq
        %v199 = vshrl.u32 %v198, 7
        %v200 = vsub.s32 %v197, %v199
        %v201 = vrot.slane %v187, %v200
        %v202 = vcombine.low %v194, %v201
        %v204 = vunpack.c.l.s4 1966171168
        %v205 = vunpack.c.0.s8 %v204
        %v206 = vlaneseq
        %v207 = vshrl.u32 %v206, 7
        %v208 = vsub.s32 %v205, %v207
        %v209 = vrot.slane %v202, %v208
        %v210 = vlaneseq
        %vm211 = vcmp.ge.s32.totalorder %v210, 0
        %vm212 = vcmp.lt.s32.totalorder %v210, 512
        %vm213 = vmand %vm211, %vm212
        %214 = vst.msk [vmem:[%s121] sm:$0xf] %vm213, %v209
        %s215 = sand.u32 %s63, 1
        %s216 = scalar_lea.sflag [#allocation3], %s215
        %s217 = sand.u32 %s63, 1
        %s218 = smul.addr %s217, 4
        %s219 = scalar_lea.vmem [#allocation2], %s218
        // Predicated region
        $region25: #{tpu_custom_call.1} parent=23 // pred_check
          %p220 = pneg %p73
        $region26: #{tpu_custom_call.1} parent=23 // pred_check_branch
          %222 = sbr.rel (%p220) target = $region28
        $region27: #{tpu_custom_call.1} parent=23 // pred_region
          %s223 = smul.u32 4, %s19
          %s225 = ssub.s32 64, 64
          %226 = vsyncadd %s216, %s225
          %s227 = smul.addr %s20, 4
          %s228 = sadd.s32 %s223, %s227
          %s229 = smul.addr %s228, 16
          %s230 = scalar_lea.hbm %s1, %s229
          %s232 = sshll.u32 %s219, 4
          %s233 = int_to_ptr.vmem [resolvable:$true] %s232
          %235 = dma.vmem_to_hbm [thread:$0]  %s233, 64, %s230, %s216
        $region28: #{tpu_custom_call.1} parent=23 // pred_fallthru
          _
      $region24: #{tpu_custom_call.1} parent=5 // pred_fallthru
        _
      %p236 = scmp.le.s32.totalorder 2, %s10
      // Predicated region
      $region29: #{tpu_custom_call.1} parent=5 // pred_check
        %p237 = pneg %p236
      $region30: #{tpu_custom_call.1} parent=5 // pred_check_branch
        %239 = sbr.rel (%p237) target = $region32
      $region31: #{tpu_custom_call.1} parent=5 // pred_region
        %s240 = ssub.s32 %s10, 2
        // Predicated region
        $region33: #{tpu_custom_call.1} parent=31 // pred_check
          %p241 = pneg %p79
        $region34: #{tpu_custom_call.1} parent=31 // pred_check_branch
          %243 = sbr.rel (%p241) target = $region36
        $region35: #{tpu_custom_call.1} parent=31 // pred_region
          %s244 = sand.u32 %s64, 1
          %s245 = scalar_lea.sflag [#allocation3], %s244
          %s246 = sand.u32 %s64, 1
          %s247 = smul.addr %s246, 4
          %s248 = scalar_lea.vmem [#allocation2], %s247
          %249 = dma.done %s245, 64
        $region36: #{tpu_custom_call.1} parent=31 // pred_fallthru
          _
      $region32: #{tpu_custom_call.1} parent=5 // pred_fallthru
        _
    $region6: #{tpu_custom_call.1} parent=1 // loop_footer
      %s14 = sadd.s32 1, %s10
    $region7: #{tpu_custom_call.1} parent=1 // loop_footer_branch
      %9 = sbr.rel target = $region3
    $region8: #{tpu_custom_call.1} parent=1 // loop_exit
      _
    %250 = vsyncpa [#allocation3], 1
    %s251 = scalar_lea.sflag [#allocation3], 1
    %252 = vsyncpa %s251, 1

</llo_original>
